<compile_context>
chip_gen: v5e
topology: v5e:2x2
jax: 0.10.0
libtpu: 0.0.40
codegen_flags: <defaults>
</compile_context>

<pallas_src>
import functools
import math

import jax
import jax.numpy as jnp
from jax.experimental import pallas as pl
from jax.experimental.pallas import tpu as pltpu


def _lstm2_kernel(x_ref, wih_ref, whh_ref, b_ref, h_ref, *, C):
    """Two-step LSTM cell with identical inputs at both timesteps, h0=c0=0.

    x_ref:   (Bp, C)   float32   (Bp = batch padded to a multiple of 8)
    wih_ref: (C, 4C)   f32 or bf16 (unpadded, PyTorch gate order i,f,g,o)
    whh_ref: (C, 4C)   f32 or bf16
    b_ref:   (1, 4C)   float32   (bias_ih + bias_hh)
    h_ref:   (Bp, C)   float32   output h_n
    """
    x = x_ref[...]
    wih = wih_ref[...]
    whh = whh_ref[...]
    b = b_ref[...]
    mm_dtype = wih.dtype          # matmul operand dtype (f32, or bf16 on v6e/v7x)

    # Input-path gate pre-activations; shared by both timesteps (same input x).
    xg = jnp.dot(x.astype(mm_dtype), wih,
                 preferred_element_type=jnp.float32) + b          # (Bp, 4C) f32

    def sigmoid(v):
        # sigmoid(v) == 0.5 * tanh(0.5 * v) + 0.5 : one EUP tanh + one VPU fma.
        return 0.5 * jnp.tanh(0.5 * v) + 0.5

    # ---- t = 0 : h0 = c0 = 0, so the forget path is dead math ----
    i1 = sigmoid(xg[:, 0 * C:1 * C])
    g1 = jnp.tanh(xg[:, 2 * C:3 * C])
    o1 = sigmoid(xg[:, 3 * C:4 * C])
    c1 = i1 * g1                                                   # (Bp, C)
    h1 = o1 * jnp.tanh(c1)                                         # (Bp, C)

    # ---- t = 1 : same input -> reuse xg; recurrence K is just C ----
    gates2 = xg + jnp.dot(h1.astype(mm_dtype), whh,
                          preferred_element_type=jnp.float32)      # (Bp, 4C)
    i2 = sigmoid(gates2[:, 0 * C:1 * C])
    f2 = sigmoid(gates2[:, 1 * C:2 * C])
    g2 = jnp.tanh(gates2[:, 2 * C:3 * C])
    o2 = sigmoid(gates2[:, 3 * C:4 * C])
    c2 = f2 * c1 + i2 * g2
    h2 = o2 * jnp.tanh(c2)                                         # (Bp, C)

    h_ref[...] = h2


def prepare_prob_transfer_params(weight_ih, weight_hh, bias_ih, bias_hh,
                                 matmul_dtype=jnp.float32):
    """One-time parameter prep (hoisted out of the per-call path).

    weight_ih / weight_hh: (4C, C) PyTorch LSTM layout; bias_*: (4C,).
    matmul_dtype: jnp.float32 (default, exact) or jnp.bfloat16 (v6e/v7x MXU —
                  halves weight DMA, relax test tolerance to ~1e-2).
    Returns (wih (C,4C), whh (C,4C), b (1,4C) f32, C).
    """
    four_c, C = weight_ih.shape
    assert four_c == 4 * C
    wih = weight_ih.T.astype(matmul_dtype)                         # (C, 4C)
    whh = weight_hh.T.astype(matmul_dtype)                         # (C, 4C)
    b = (bias_ih + bias_hh).astype(jnp.float32).reshape(1, 4 * C)  # (1, 4C)
    return wih, whh, b, C


def prob_transfer_pallas(x, wih, whh, b, C):
    """x: (B, C); prepped params from prepare_prob_transfer_params.
    Returns h_n of shape (B, C), float32."""
    B = x.shape[0]
    # Pad batch to the f32 sublane minimum (8) so every vector op and the
    # output store is a full unmasked vreg; padded rows are sliced off below.
    Bp = ((B + 7) // 8) * 8
    xp = x.astype(jnp.float32)
    if Bp != B:
        xp = jnp.pad(xp, ((0, Bp - B), (0, 0)))

    G = 4 * C
    w_bytes = jnp.dtype(wih.dtype).itemsize
    flops = 2 * (2 * Bp * C * G) + 30 * Bp * C          # 2 matmuls + gate math
    transcendentals = 9 * Bp * C                         # 9 tanh-class ops/elem
    bytes_accessed = (4 * (Bp * C) +                     # x
                      w_bytes * 2 * C * G +              # wih + whh
                      4 * G +                            # bias
                      4 * (Bp * C))                      # output

    out = pl.pallas_call(
        functools.partial(_lstm2_kernel, C=C),
        out_shape=jax.ShapeDtypeStruct((Bp, C), jnp.float32),
        in_specs=[pl.BlockSpec(memory_space=pltpu.MemorySpace.VMEM)
                  for _ in range(4)],
        out_specs=pl.BlockSpec(memory_space=pltpu.MemorySpace.VMEM),
        cost_estimate=pl.CostEstimate(
            flops=flops,
            transcendentals=transcendentals,
            bytes_accessed=bytes_accessed),
    )(xp, wih, whh, b)

    return out[:B]


def prob_transfer_ref(x, weight_ih, weight_hh, bias_ih, bias_hh):
    """Pure-JAX reference of the 2-step LSTM (PyTorch semantics)."""
    B, C = x.shape
    b = bias_ih + bias_hh

    def cell(h, c, inp):
        gates = inp @ weight_ih.T + h @ weight_hh.T + b
        i = jax.nn.sigmoid(gates[:, 0 * C:1 * C])
        f = jax.nn.sigmoid(gates[:, 1 * C:2 * C])
        g = jnp.tanh(gates[:, 2 * C:3 * C])
        o = jax.nn.sigmoid(gates[:, 3 * C:4 * C])
        c = f * c + i * g
        h = o * jnp.tanh(c)
        return h, c

    h = jnp.zeros((B, C), jnp.float32)
    c = jnp.zeros((B, C), jnp.float32)
    h, c = cell(h, c, x)   # t = 0
    h, c = cell(h, c, x)   # t = 1 (same input)
    return h


if __name__ == "__main__":
    num_of_channels = 32   # C
    batch = 4              # B

    key = jax.random.PRNGKey(0)
    k_x, k_wih, k_whh, k_bih, k_bhh = jax.random.split(key, 5)

    # Deterministic synthetic LSTM parameters (PyTorch init: U(-1/sqrt(H), 1/sqrt(H)))
    bound = 1.0 / math.sqrt(num_of_channels)
    weight_ih = jax.random.uniform(k_wih, (4 * num_of_channels, num_of_channels),
                                   jnp.float32, -bound, bound)
    weight_hh = jax.random.uniform(k_whh, (4 * num_of_channels, num_of_channels),
                                   jnp.float32, -bound, bound)
    bias_ih = jax.random.uniform(k_bih, (4 * num_of_channels,), jnp.float32, -bound, bound)
    bias_hh = jax.random.uniform(k_bhh, (4 * num_of_channels,), jnp.float32, -bound, bound)

    x = jax.random.normal(k_x, (batch, num_of_channels), jnp.float32)

    # One-time, hoisted parameter prep (transpose / cast).  Use
    # matmul_dtype=jnp.bfloat16 on v6e/v7x for half the weight DMA (relax
    # the tolerance below to ~1e-2 in that case).
    wih, whh, b, C = prepare_prob_transfer_params(
        weight_ih, weight_hh, bias_ih, bias_hh, matmul_dtype=jnp.float32)

    out = prob_transfer_pallas(x, wih, whh, b, C)
    out = jax.block_until_ready(out)

    ref = prob_transfer_ref(x, weight_ih, weight_hh, bias_ih, bias_hh)
    assert out.shape == (batch, num_of_channels)
    assert jnp.allclose(out, ref, atol=1e-5, rtol=1e-5)

    print("KERNEL_OK")
</pallas_src>

<mosaic_0001>
module attributes {stable_mosaic.version = 11 : i64} {
  func.func @_lstm2_kernel(%arg0: memref<8x32xf32, #tpu.memory_space<vmem>>, %arg1: memref<32x128xf32, #tpu.memory_space<vmem>>, %arg2: memref<32x128xf32, #tpu.memory_space<vmem>>, %arg3: memref<1x128xf32, #tpu.memory_space<vmem>>, %arg4: memref<8x32xf32, #tpu.memory_space<vmem>>) attributes {dimension_semantics = [], scalar_prefetch = 0 : i64, scratch_operands = 0 : i64, tpu.core_type = #tpu.core_type<tc>} {
    %c0 = arith.constant 0 : index
    %c0_0 = arith.constant 0 : index
    %0 = vector.load %arg0[%c0, %c0_0] : memref<8x32xf32, #tpu.memory_space<vmem>>, vector<8x32xf32>
    %c0_1 = arith.constant 0 : index
    %c0_2 = arith.constant 0 : index
    %1 = vector.load %arg1[%c0_1, %c0_2] : memref<32x128xf32, #tpu.memory_space<vmem>>, vector<32x128xf32>
    %c0_3 = arith.constant 0 : index
    %c0_4 = arith.constant 0 : index
    %2 = vector.load %arg2[%c0_3, %c0_4] : memref<32x128xf32, #tpu.memory_space<vmem>>, vector<32x128xf32>
    %c0_5 = arith.constant 0 : index
    %c0_6 = arith.constant 0 : index
    %3 = vector.load %arg3[%c0_5, %c0_6] : memref<1x128xf32, #tpu.memory_space<vmem>>, vector<1x128xf32>
    %cst = arith.constant dense<0.000000e+00> : vector<8x128xf32>
    %4 = tpu.matmul %0, %1, %cst {dimension_numbers = #tpu.dot_dimension_numbers<[1], [0], [0], [1], [0, 0, 1, 1], [], []>} : vector<8x32xf32>, vector<32x128xf32>, vector<8x128xf32> -> vector<8x128xf32>
    %5 = vector.broadcast %3 : vector<1x128xf32> to vector<8x128xf32>
    %6 = arith.addf %4, %5 : vector<8x128xf32>
    %7 = vector.extract_strided_slice %6 {offsets = [0, 0], sizes = [8, 32], strides = [1, 1]} : vector<8x128xf32> to vector<8x32xf32>
    %cst_7 = arith.constant 5.000000e-01 : f32
    %8 = vector.broadcast %cst_7 : f32 to vector<8x32xf32>
    %9 = arith.mulf %8, %7 : vector<8x32xf32>
    %10 = math.tanh %9 : vector<8x32xf32>
    %cst_8 = arith.constant 5.000000e-01 : f32
    %11 = vector.broadcast %cst_8 : f32 to vector<8x32xf32>
    %12 = arith.mulf %11, %10 : vector<8x32xf32>
    %cst_9 = arith.constant 5.000000e-01 : f32
    %13 = vector.broadcast %cst_9 : f32 to vector<8x32xf32>
    %14 = arith.addf %12, %13 : vector<8x32xf32>
    %15 = vector.extract_strided_slice %6 {offsets = [0, 64], sizes = [8, 32], strides = [1, 1]} : vector<8x128xf32> to vector<8x32xf32>
    %16 = math.tanh %15 : vector<8x32xf32>
    %17 = vector.extract_strided_slice %6 {offsets = [0, 96], sizes = [8, 32], strides = [1, 1]} : vector<8x128xf32> to vector<8x32xf32>
    %cst_10 = arith.constant 5.000000e-01 : f32
    %18 = vector.broadcast %cst_10 : f32 to vector<8x32xf32>
    %19 = arith.mulf %18, %17 : vector<8x32xf32>
    %20 = math.tanh %19 : vector<8x32xf32>
    %cst_11 = arith.constant 5.000000e-01 : f32
    %21 = vector.broadcast %cst_11 : f32 to vector<8x32xf32>
    %22 = arith.mulf %21, %20 : vector<8x32xf32>
    %cst_12 = arith.constant 5.000000e-01 : f32
    %23 = vector.broadcast %cst_12 : f32 to vector<8x32xf32>
    %24 = arith.addf %22, %23 : vector<8x32xf32>
    %25 = arith.mulf %14, %16 : vector<8x32xf32>
    %26 = math.tanh %25 : vector<8x32xf32>
    %27 = arith.mulf %24, %26 : vector<8x32xf32>
    %cst_13 = arith.constant dense<0.000000e+00> : vector<8x128xf32>
    %28 = tpu.matmul %27, %2, %cst_13 {dimension_numbers = #tpu.dot_dimension_numbers<[1], [0], [0], [1], [0, 0, 1, 1], [], []>} : vector<8x32xf32>, vector<32x128xf32>, vector<8x128xf32> -> vector<8x128xf32>
    %29 = arith.addf %6, %28 : vector<8x128xf32>
    %30 = vector.extract_strided_slice %29 {offsets = [0, 0], sizes = [8, 32], strides = [1, 1]} : vector<8x128xf32> to vector<8x32xf32>
    %cst_14 = arith.constant 5.000000e-01 : f32
    %31 = vector.broadcast %cst_14 : f32 to vector<8x32xf32>
    %32 = arith.mulf %31, %30 : vector<8x32xf32>
    %33 = math.tanh %32 : vector<8x32xf32>
    %cst_15 = arith.constant 5.000000e-01 : f32
    %34 = vector.broadcast %cst_15 : f32 to vector<8x32xf32>
    %35 = arith.mulf %34, %33 : vector<8x32xf32>
    %cst_16 = arith.constant 5.000000e-01 : f32
    %36 = vector.broadcast %cst_16 : f32 to vector<8x32xf32>
    %37 = arith.addf %35, %36 : vector<8x32xf32>
    %38 = vector.extract_strided_slice %29 {offsets = [0, 32], sizes = [8, 32], strides = [1, 1]} : vector<8x128xf32> to vector<8x32xf32>
    %cst_17 = arith.constant 5.000000e-01 : f32
    %39 = vector.broadcast %cst_17 : f32 to vector<8x32xf32>
    %40 = arith.mulf %39, %38 : vector<8x32xf32>
    %41 = math.tanh %40 : vector<8x32xf32>
    %cst_18 = arith.constant 5.000000e-01 : f32
    %42 = vector.broadcast %cst_18 : f32 to vector<8x32xf32>
    %43 = arith.mulf %42, %41 : vector<8x32xf32>
    %cst_19 = arith.constant 5.000000e-01 : f32
    %44 = vector.broadcast %cst_19 : f32 to vector<8x32xf32>
    %45 = arith.addf %43, %44 : vector<8x32xf32>
    %46 = vector.extract_strided_slice %29 {offsets = [0, 64], sizes = [8, 32], strides = [1, 1]} : vector<8x128xf32> to vector<8x32xf32>
    %47 = math.tanh %46 : vector<8x32xf32>
    %48 = vector.extract_strided_slice %29 {offsets = [0, 96], sizes = [8, 32], strides = [1, 1]} : vector<8x128xf32> to vector<8x32xf32>
    %cst_20 = arith.constant 5.000000e-01 : f32
    %49 = vector.broadcast %cst_20 : f32 to vector<8x32xf32>
    %50 = arith.mulf %49, %48 : vector<8x32xf32>
    %51 = math.tanh %50 : vector<8x32xf32>
    %cst_21 = arith.constant 5.000000e-01 : f32
    %52 = vector.broadcast %cst_21 : f32 to vector<8x32xf32>
    %53 = arith.mulf %52, %51 : vector<8x32xf32>
    %cst_22 = arith.constant 5.000000e-01 : f32
    %54 = vector.broadcast %cst_22 : f32 to vector<8x32xf32>
    %55 = arith.addf %53, %54 : vector<8x32xf32>
    %56 = arith.mulf %45, %25 : vector<8x32xf32>
    %57 = arith.mulf %37, %47 : vector<8x32xf32>
    %58 = arith.addf %56, %57 : vector<8x32xf32>
    %59 = math.tanh %58 : vector<8x32xf32>
    %60 = arith.mulf %55, %59 : vector<8x32xf32>
    %c0_23 = arith.constant 0 : index
    %c0_24 = arith.constant 0 : index
    %61 = vector.load %arg4[%c0_23, %c0_24] : memref<8x32xf32, #tpu.memory_space<vmem>>, vector<8x32xf32>
    tpu.vector_store %arg4[%c0_23, %c0_24], %60 {strides = array<i32>} : memref<8x32xf32, #tpu.memory_space<vmem>>, vector<8x32xf32>,
    return
  }
}

</mosaic_0001>

<llo_original>
// kernel: tpu_custom_call.1
$region0: #{tpu_custom_call.1}
  #allocation0 [shape = 'u32[]', space=smem, size = 0x4, offset = 0x4, fixed_abs, tag = 'smem constant byte address 0x4 - core index']
  #allocation1 [shape = 'u32[72,128]{1,0:T(1,128)}', space=vmem, size = 0x9000, scoped, tag = 'internal scratch']
  %s0 = inlined_call_operand.hbm [shape: f32[8,32], index: 0, kind: input, shape index: {}]
  %s1 = inlined_call_operand.hbm [shape: f32[32,128], index: 1, kind: input, shape index: {}]
  %s2 = inlined_call_operand.hbm [shape: f32[32,128], index: 2, kind: input, shape index: {}]
  %s3 = inlined_call_operand.vmem [shape: f32[1,128], index: 3, kind: input, shape index: {}]
  %s4 = inlined_call_operand.hbm [shape: f32[8,32], index: 4, kind: output, shape index: {}]
  %s5 = sld [smem:[#allocation0]]
  $region38: #{tpu_custom_call.1} parent=0
    _
  %s7 = ssub.s32 1, %s5
  %s8 = scalar_select 0, %s7, %s5
  $region1: #{tpu_custom_call.1} parent=0
    #allocation2 [shape = 'u8[4096]{0}', space=vmem, size = 0x1000, scoped, tag = 'input window, operand 0, single buffered']
    #allocation3 [shape = 's32[1]{0}', space=sflag, size = 0x4, scoped, tag = 'scoped memory for tpu_custom_call.1']
    #allocation4 [shape = 's32[1]{0}', space=sflag, size = 0x4, scoped, tag = 'scoped memory for tpu_custom_call.1']
    #allocation5 [shape = 'u8[16384]{0}', space=vmem, size = 0x4000, scoped, tag = 'input window, operand 1, single buffered']
    #allocation6 [shape = 's32[1]{0}', space=sflag, size = 0x4, scoped, tag = 'scoped memory for tpu_custom_call.1']
    #allocation7 [shape = 'u8[16384]{0}', space=vmem, size = 0x4000, scoped, tag = 'input window, operand 2, single buffered']
    #allocation8 [shape = 'u8[4096]{0}', space=vmem, size = 0x1000, scoped, tag = 'output window, operand 0, single buffered']
    %9 = vsyncpa [#allocation3], 0
    %10 = vsyncpa [#allocation6], 0
    %11 = vsyncpa [#allocation4], 0
    // Predicated region
    $region2: #{tpu_custom_call.1} parent=1 // pred_check
      _
    $region3: #{tpu_custom_call.1} parent=1 // pred_check_branch
      %13 = sbr.rel (0) target = $region5
    $region4: #{tpu_custom_call.1} parent=1 // pred_region
      %15 = vsyncadd [#allocation3], 0
      %s17 = sshll.u32 %s0, 4
      %s18 = int_to_ptr.hbm [resolvable:$true] %s17
      %s19 = sshll.u32 [#allocation2], 4
      %s20 = int_to_ptr.vmem [resolvable:$true] %s19
      %22 = dma.hbm_to_vmem [thread:$0]  %s18, 128, %s20, [#allocation3]
    $region5: #{tpu_custom_call.1} parent=1 // pred_fallthru
      _
    // Predicated region
    $region6: #{tpu_custom_call.1} parent=1 // pred_check
      _
    $region7: #{tpu_custom_call.1} parent=1 // pred_check_branch
      %24 = sbr.rel (0) target = $region9
    $region8: #{tpu_custom_call.1} parent=1 // pred_region
      %26 = vsyncadd [#allocation6], 0
      %s27 = sshll.u32 %s1, 4
      %s28 = int_to_ptr.hbm [resolvable:$true] %s27
      %s29 = sshll.u32 [#allocation5], 4
      %s30 = int_to_ptr.vmem [resolvable:$true] %s29
      %35 = dma.hbm_to_vmem [thread:$0]  %s28, 512, %s30, [#allocation6], 128, 128, 8
    $region9: #{tpu_custom_call.1} parent=1 // pred_fallthru
      _
    // Predicated region
    $region10: #{tpu_custom_call.1} parent=1 // pred_check
      _
    $region11: #{tpu_custom_call.1} parent=1 // pred_check_branch
      %37 = sbr.rel (0) target = $region13
    $region12: #{tpu_custom_call.1} parent=1 // pred_region
      %39 = vsyncadd [#allocation6], 0
      %s40 = sshll.u32 %s2, 4
      %s41 = int_to_ptr.hbm [resolvable:$true] %s40
      %s42 = sshll.u32 [#allocation7], 4
      %s43 = int_to_ptr.vmem [resolvable:$true] %s42
      %48 = dma.hbm_to_vmem [thread:$0]  %s41, 512, %s43, [#allocation6], 128, 128, 8
    $region13: #{tpu_custom_call.1} parent=1 // pred_fallthru
      _
    // Predicated region
    $region14: #{tpu_custom_call.1} parent=1 // pred_check
      _
    $region15: #{tpu_custom_call.1} parent=1 // pred_check_branch
      %50 = sbr.rel (0) target = $region17
    $region16: #{tpu_custom_call.1} parent=1 // pred_region
      _
    $region17: #{tpu_custom_call.1} parent=1 // pred_fallthru
      _
    // Predicated region
    $region18: #{tpu_custom_call.1} parent=1 // pred_check
      _
    $region19: #{tpu_custom_call.1} parent=1 // pred_check_branch
      %52 = sbr.rel (0) target = $region21
    $region20: #{tpu_custom_call.1} parent=1 // pred_region
      %54 = dma.done [#allocation3], 128
    $region21: #{tpu_custom_call.1} parent=1 // pred_fallthru
      _
    // Predicated region
    $region22: #{tpu_custom_call.1} parent=1 // pred_check
      _
    $region23: #{tpu_custom_call.1} parent=1 // pred_check_branch
      %56 = sbr.rel (0) target = $region25
    $region24: #{tpu_custom_call.1} parent=1 // pred_region
      %58 = dma.done [#allocation6], 512
    $region25: #{tpu_custom_call.1} parent=1 // pred_fallthru
      _
    // Predicated region
    $region26: #{tpu_custom_call.1} parent=1 // pred_check
      _
    $region27: #{tpu_custom_call.1} parent=1 // pred_check_branch
      %60 = sbr.rel (0) target = $region29
    $region28: #{tpu_custom_call.1} parent=1 // pred_region
      %62 = dma.done [#allocation6], 512
    $region29: #{tpu_custom_call.1} parent=1 // pred_fallthru
      _
    %v63 = vld [vmem:[#allocation2] sm:$0xff]
    %v64 = vld [vmem:[#allocation5] sm:$0xff]
    %v65 = vld [vmem:[#allocation5 + $0x8] sm:$0xff]
    %v66 = vld [vmem:[#allocation5 + $0x10] sm:$0xff]
    %v67 = vld [vmem:[#allocation5 + $0x18] sm:$0xff]
    %v68 = vld [vmem:[#allocation7] sm:$0xff]
    %v69 = vld [vmem:[#allocation7 + $0x8] sm:$0xff]
    %v70 = vld [vmem:[#allocation7 + $0x10] sm:$0xff]
    %v71 = vld [vmem:[#allocation7 + $0x18] sm:$0xff]
    %v72 = vld [vmem:[%s3] sm:$0x1]
    %v74 = vperm.slane %v72, 0
    %vm76 = vcmask 261120
    %v78 = vsel %vm76, %v63, 0
    %80 = vmatpush.msra.mxu0 0.0
    %81 = vmatpush.msra.mxu0 0.0
    %82 = vmatpush.msra.mxu0 0.0
    %83 = vmatpush.msra.mxu0 0.0
    %84 = vmatpush.msra.mxu0 0.0
    %85 = vmatpush.msra.mxu0 0.0
    %86 = vmatpush.msra.mxu0 0.0
    %87 = vmatpush.msra.mxu0 0.0
    %88 = vmatpush.msra.mxu0 0.0
    %89 = vmatpush.msra.mxu0 0.0
    %90 = vmatpush.msra.mxu0 0.0
    %91 = vmatpush.msra.mxu0 0.0
    %92 = vmatpush.msra.mxu0 %v67
    %93 = vmatpush.msra.mxu0 %v66
    %94 = vmatpush.msra.mxu0 %v65
    %95 = vmatpush.msra.mxu0 %v64
    %96 = vmatmul.f32.gmra.mxu0 %v78
    %v97 = vpop.f32.mrf.mxu0
    %v98 = vadd.f32 %v74, %v97
    %99 = vdwg.mxu0
    %v100 = vmul.f32 %v98, 0.5
    %v101 = vtanh.pop %v100
    %v102 = vmul.f32 %v101, 0.5
    %v103 = vadd.f32 %v102, 0.5
    %v104 = vtanh.pop %v98
    %106 = vrot.lane.b32.xlu0 %v104, 64
    %v107 = vpop.permute.xlu0 %106
    %v109 = vmul.f32 %v103, %v107
    %v110 = vtanh.pop %v109
    %112 = vrot.lane.b32.xlu0 %v110, 96
    %v113 = vpop.permute.xlu0 %112
    %v115 = vmul.f32 %v103, %v113
    %117 = vrot.lane.b32.xlu0 %v115, 32
    %v118 = vpop.permute.xlu0 %117
    %v119 = vsel %vm76, %v118, 0
    %121 = vmatpush.msra.mxu0 0.0
    %122 = vmatpush.msra.mxu0 0.0
    %123 = vmatpush.msra.mxu0 0.0
    %124 = vmatpush.msra.mxu0 0.0
    %125 = vmatpush.msra.mxu0 0.0
    %126 = vmatpush.msra.mxu0 0.0
    %127 = vmatpush.msra.mxu0 0.0
    %128 = vmatpush.msra.mxu0 0.0
    %129 = vmatpush.msra.mxu0 0.0
    %130 = vmatpush.msra.mxu0 0.0
    %131 = vmatpush.msra.mxu0 0.0
    %132 = vmatpush.msra.mxu0 0.0
    %133 = vmatpush.msra.mxu0 %v71
    %134 = vmatpush.msra.mxu0 %v70
    %135 = vmatpush.msra.mxu0 %v69
    %136 = vmatpush.msra.mxu0 %v68
    %137 = vmatmul.f32.gmra.mxu0 %v119
    %v138 = vpop.f32.mrf.mxu0
    %v139 = vadd.f32 0.0, %v138
    %140 = vdwg.mxu0
    %v141 = vadd.f32 %v98, %v139
    %v142 = vmul.f32 %v141, 0.5
    %v143 = vtanh.pop %v142
    %v144 = vmul.f32 %v143, 0.5
    %v145 = vadd.f32 %v144, 0.5
    %v146 = vtanh.pop %v141
    %148 = vrot.lane.b32.xlu0 %v109, 32
    %v149 = vpop.permute.xlu0 %148
    %v151 = vmul.f32 %v145, %v149
    %153 = vrot.lane.b32.xlu0 %v146, 64
    %v154 = vpop.permute.xlu0 %153
    %v156 = vmul.f32 %v145, %v154
    %158 = vrot.lane.b32.xlu0 %v156, 32
    %v159 = vpop.permute.xlu0 %158
    %v161 = vadd.f32 %v151, %v159
    %v162 = vtanh.pop %v161
    %164 = vrot.lane.b32.xlu0 %v162, 64
    %v165 = vpop.permute.xlu0 %164
    %v167 = vmul.f32 %v145, %v165
    %169 = vrot.lane.b32.xlu0 %v167, 32
    %v170 = vpop.permute.xlu0 %169
    %172 = vst.msk [vmem:[#allocation8] sm:$0xff] %vm76, %v170
    // Predicated region
    $region30: #{tpu_custom_call.1} parent=1 // pred_check
      _
    $region31: #{tpu_custom_call.1} parent=1 // pred_check_branch
      %174 = sbr.rel (0) target = $region33
    $region32: #{tpu_custom_call.1} parent=1 // pred_region
      %176 = vsyncadd [#allocation4], 0
      %s178 = sshll.u32 [#allocation8], 4
      %s179 = int_to_ptr.vmem [resolvable:$true] %s178
      %s180 = sshll.u32 %s4, 4
      %s181 = int_to_ptr.hbm [resolvable:$true] %s180
      %183 = dma.vmem_to_hbm [thread:$0]  %s179, 128, %s181, [#allocation4]
    $region33: #{tpu_custom_call.1} parent=1 // pred_fallthru
      _
    // Predicated region
    $region34: #{tpu_custom_call.1} parent=1 // pred_check
      _
    $region35: #{tpu_custom_call.1} parent=1 // pred_check_branch
      %185 = sbr.rel (0) target = $region37
    $region36: #{tpu_custom_call.1} parent=1 // pred_region
      %187 = dma.done [#allocation4], 128
    $region37: #{tpu_custom_call.1} parent=1 // pred_fallthru
      _
    %188 = vsyncpa [#allocation3], 1
    %189 = vsyncpa [#allocation6], 1
    %190 = vsyncpa [#allocation4], 1

</llo_original>
